<compile_context>
chip_gen: v6e
topology: v6e:2x2x1
jax: 0.10.0
libtpu: 0.0.40
codegen_flags: <defaults>
</compile_context>

<pallas_src>
import math

import jax
import jax.numpy as jnp
from jax.experimental import pallas as pl
from jax.experimental.pallas import tpu as pltpu

DIMENSIONS = ['cohesion', 'syntax', 'vocabulary', 'phraseology', 'grammar', 'conventions']
N_OUT = len(DIMENSIONS)      # 6
H1 = 200
H2 = 100

# lane-aligned (padded) hidden sizes; output padded only to 8 (sublane multiple)
H1_PAD = 256
H2_PAD = 128
N_OUT_PAD = 8


def _round_up(n, m):
    return ((n + m - 1) // m) * m


def _pad_to(a, shape):
    pads = [(0, t - s) for s, t in zip(a.shape, shape)]
    return jnp.pad(a, pads)


def _mlp_kernel(x_ref, w1_ref, b1_ref, w2_ref, b2_ref, w3_ref, b3_ref, o_ref):
    dot_dtype = w1_ref.dtype
    # hidden1 + ReLU (MXU dot in dot_dtype, accumulate/bias/ReLU in f32)
    h1 = jnp.dot(x_ref[...].astype(dot_dtype), w1_ref[...],
                 preferred_element_type=jnp.float32)
    h1 = jnp.maximum(h1 + b1_ref[...], 0.0)
    # hidden2 + ReLU
    h2 = jnp.dot(h1.astype(dot_dtype), w2_ref[...],
                 preferred_element_type=jnp.float32)
    h2 = jnp.maximum(h2 + b2_ref[...], 0.0)
    # output (no activation); narrow 8-wide store -> minimal HBM writeback
    out = jnp.dot(h2.astype(dot_dtype), w3_ref[...],
                  preferred_element_type=jnp.float32)
    o_ref[...] = (out + b3_ref[...]).astype(o_ref.dtype)


def _vmem_budget_bytes():
    """Scoped-VMEM budget per generation: ~48 MiB on v7x (64 MiB physical),
    up to ~96 MiB on v5e/v6e (128 MiB physical)."""
    cap = 64 * 1024 * 1024   # conservative fallback (v7x physical)
    try:
        cap = int(pltpu.get_tpu_info().vmem_capacity_bytes)
    except Exception:
        pass
    return int(min(cap * 3 // 4, 100 * 1024 * 1024))


def _choose_batch_tile(B, D, batch_tile, itemsize, budget):
    sub = 8  # x tile stays f32 in HBM -> 8-row sublane multiple
    # per-row VMEM cost: double-buffered x + out tiles, in-kernel casts,
    # f32 intermediates h1/h2/out.
    per_row = (2 * D * 4                       # x, f32, double-buffered
               + D * itemsize                  # x cast to dot dtype
               + H1_PAD * (4 + itemsize)       # h1 f32 + bf16 cast
               + H2_PAD * (4 + itemsize)       # h2 f32 + bf16 cast
               + 3 * N_OUT_PAD * 4)            # out f32 + double-buffered out tile
    # batch-independent: double-buffered weights + (sublane/lane-padded) biases
    fixed = (2 * (D * H1_PAD + H1_PAD * H2_PAD + H2_PAD * N_OUT_PAD) * itemsize
             + 2 * 8 * (H1_PAD + H2_PAD + 128) * 4)
    max_rows = max(sub, ((budget - fixed) // per_row) // sub * sub)
    if B <= batch_tile:
        # split a single-tile batch into (at least) two parallel tiles so both
        # v7x TensorCores get work; costs one extra ~0.35us grid step.
        bt = _round_up(max(1, -(-B // 2)), sub)
    else:
        bt = batch_tile
    return max(sub, min(bt, max_rows))


def nn_model_forward(x, params, *, batch_tile=2048, dot_dtype=jnp.bfloat16):
    """x: [B, input_size] float32. params: dict of w1,b1,w2,b2,w3,b3 (unpadded).

    dot_dtype: dtype fed to the MXU (bf16 default = native MXU rate on all gens);
    bias add / ReLU / accumulation always happen in float32. Pass
    dot_dtype=jnp.float32 for bit-close agreement with the PyTorch forward.
    """
    B, D = x.shape
    itemsize = jnp.dtype(dot_dtype).itemsize

    # ---- pad weights/biases (zero padding + ReLU(0)=0 => exact no-op) ----
    w1 = _pad_to(params["w1"], (D, H1_PAD)).astype(dot_dtype)
    b1 = _pad_to(params["b1"], (1, H1_PAD)).astype(jnp.float32)
    w2 = _pad_to(params["w2"], (H1_PAD, H2_PAD)).astype(dot_dtype)
    b2 = _pad_to(params["b2"], (1, H2_PAD)).astype(jnp.float32)
    w3 = _pad_to(params["w3"], (H2_PAD, N_OUT_PAD)).astype(dot_dtype)
    b3 = _pad_to(params["b3"], (1, N_OUT_PAD)).astype(jnp.float32)

    # ---- choose the batch tile under the corrected VMEM budget ----
    vmem_budget = _vmem_budget_bytes()
    bt = _choose_batch_tile(B, D, batch_tile, itemsize, vmem_budget)

    # ---- pad ragged batch to a multiple of the tile (x stays f32: no pre-cast) ----
    B_pad = _round_up(B, bt)
    if B_pad != B:
        x = jnp.pad(x, ((0, B_pad - B), (0, 0)))

    grid = (B_pad // bt,)

    flops = 2 * B_pad * (D * H1_PAD + H1_PAD * H2_PAD + H2_PAD * N_OUT_PAD)
    bytes_accessed = (B_pad * D * 4
                      + (D * H1_PAD + H1_PAD * H2_PAD + H2_PAD * N_OUT_PAD) * itemsize
                      + (H1_PAD + H2_PAD + N_OUT_PAD) * 4
                      + B_pad * N_OUT_PAD * 4)

    out = pl.pallas_call(
        _mlp_kernel,
        out_shape=jax.ShapeDtypeStruct((B_pad, N_OUT_PAD), jnp.float32),
        grid_spec=pl.GridSpec(
            grid=grid,
            in_specs=[
                pl.BlockSpec((bt, D), lambda i: (i, 0)),              # x (tiled over batch)
                pl.BlockSpec((D, H1_PAD), lambda i: (0, 0)),          # w1 (resident)
                pl.BlockSpec((1, H1_PAD), lambda i: (0, 0)),          # b1
                pl.BlockSpec((H1_PAD, H2_PAD), lambda i: (0, 0)),     # w2
                pl.BlockSpec((1, H2_PAD), lambda i: (0, 0)),          # b2
                pl.BlockSpec((H2_PAD, N_OUT_PAD), lambda i: (0, 0)),  # w3
                pl.BlockSpec((1, N_OUT_PAD), lambda i: (0, 0)),       # b3
            ],
            out_specs=pl.BlockSpec((bt, N_OUT_PAD), lambda i: (i, 0)),
        ),
        compiler_params=pltpu.CompilerParams(
            dimension_semantics=("parallel",),
            vmem_limit_bytes=vmem_budget,
        ),
        cost_estimate=pl.CostEstimate(
            flops=flops, transcendentals=0, bytes_accessed=bytes_accessed),
    )(x, w1, b1, w2, b2, w3, b3)

    # strip batch padding and the 2-column output padding (8 -> 6)
    return out[:B, :N_OUT]


def init_params(key, input_size):
    """Deterministic init mimicking PyTorch nn.Linear default (U[-1/sqrt(fan_in), +1/sqrt(fan_in)])."""
    keys = jax.random.split(key, 6)

    def linear(kw, kb, fan_in, fan_out):
        bound = 1.0 / math.sqrt(fan_in)
        w = jax.random.uniform(kw, (fan_in, fan_out), jnp.float32, -bound, bound)
        b = jax.random.uniform(kb, (1, fan_out), jnp.float32, -bound, bound)
        return w, b

    w1, b1 = linear(keys[0], keys[1], input_size, H1)
    w2, b2 = linear(keys[2], keys[3], H1, H2)
    w3, b3 = linear(keys[4], keys[5], H2, N_OUT)
    return {"w1": w1, "b1": b1, "w2": w2, "b2": b2, "w3": w3, "b3": b3}


def _reference_forward(x, p):
    h1 = jnp.maximum(x @ p["w1"] + p["b1"], 0.0)
    h2 = jnp.maximum(h1 @ p["w2"] + p["b2"], 0.0)
    return h2 @ p["w3"] + p["b3"]


if __name__ == "__main__":
    key = jax.random.PRNGKey(0)
    k_x, k_p, k_x2 = jax.random.split(key, 3)

    # ---- small exact-semantics check (f32 dots, matches PyTorch forward) ----
    batch = 8
    input_size = 32
    x = jax.random.normal(k_x, (batch, input_size), jnp.float32)
    params = init_params(k_p, input_size)

    out = nn_model_forward(x, params, dot_dtype=jnp.float32)   # exact path
    out = jax.block_until_ready(out)
    ref = _reference_forward(x, params)
    assert out.shape == (batch, N_OUT)
    assert jnp.allclose(out, ref, atol=1e-4, rtol=1e-4), "f32 mismatch vs reference"

    # ---- ragged batch, >=2 grid steps, default bf16 MXU path ----
    batch2 = 1000                                              # not a tile multiple
    x2 = jax.random.normal(k_x2, (batch2, input_size), jnp.float32)
    out2 = nn_model_forward(x2, params)                        # bf16 dots by default
    out2 = jax.block_until_ready(out2)
    ref2 = _reference_forward(x2, params)
    assert out2.shape == (batch2, N_OUT)
    assert jnp.allclose(out2, ref2, atol=1e-1, rtol=1e-1), "bf16 mismatch vs reference"

    print("KERNEL_OK")
</pallas_src>

<mosaic_0001>
module attributes {stable_mosaic.version = 11 : i64} {
  func.func @_mlp_kernel(%arg0: i32, %arg1: memref<8x32xf32, #tpu.memory_space<vmem>>, %arg2: memref<32x256xf32, #tpu.memory_space<vmem>>, %arg3: memref<1x256xf32, #tpu.memory_space<vmem>>, %arg4: memref<256x128xf32, #tpu.memory_space<vmem>>, %arg5: memref<1x128xf32, #tpu.memory_space<vmem>>, %arg6: memref<128x8xf32, #tpu.memory_space<vmem>>, %arg7: memref<1x8xf32, #tpu.memory_space<vmem>>, %arg8: memref<8x8xf32, #tpu.memory_space<vmem>>) attributes {dimension_semantics = [#tpu.dimension_semantics<parallel>], iteration_bounds = array<i64: 1>, scalar_prefetch = 0 : i64, scratch_operands = 0 : i64, tpu.core_type = #tpu.core_type<tc>, window_params = [{transform_indices = @transform_0, window_bounds = array<i64: 8, 32>}, {pipeline_mode = #tpu.pipeline_mode<synchronous>, transform_indices = @transform_1, window_bounds = array<i64: 32, 256>}, {pipeline_mode = #tpu.pipeline_mode<synchronous>, transform_indices = @transform_2, window_bounds = array<i64: 1, 256>}, {pipeline_mode = #tpu.pipeline_mode<synchronous>, transform_indices = @transform_3, window_bounds = array<i64: 256, 128>}, {pipeline_mode = #tpu.pipeline_mode<synchronous>, transform_indices = @transform_4, window_bounds = array<i64: 1, 128>}, {pipeline_mode = #tpu.pipeline_mode<synchronous>, transform_indices = @transform_5, window_bounds = array<i64: 128, 8>}, {pipeline_mode = #tpu.pipeline_mode<synchronous>, transform_indices = @transform_6, window_bounds = array<i64: 1, 8>}, {transform_indices = @transform_7, window_bounds = array<i64: 8, 8>}]} {
    %c0 = arith.constant 0 : index
    %c0_0 = arith.constant 0 : index
    %0 = vector.load %arg1[%c0, %c0_0] : memref<8x32xf32, #tpu.memory_space<vmem>>, vector<8x32xf32>
    %c0_1 = arith.constant 0 : index
    %c0_2 = arith.constant 0 : index
    %1 = vector.load %arg2[%c0_1, %c0_2] : memref<32x256xf32, #tpu.memory_space<vmem>>, vector<32x256xf32>
    %cst = arith.constant dense<0.000000e+00> : vector<8x256xf32>
    %2 = tpu.matmul %0, %1, %cst {dimension_numbers = #tpu.dot_dimension_numbers<[1], [0], [0], [1], [0, 0, 1, 1], [], []>} : vector<8x32xf32>, vector<32x256xf32>, vector<8x256xf32> -> vector<8x256xf32>
    %c0_3 = arith.constant 0 : index
    %c0_4 = arith.constant 0 : index
    %3 = vector.load %arg3[%c0_3, %c0_4] : memref<1x256xf32, #tpu.memory_space<vmem>>, vector<1x256xf32>
    %4 = vector.broadcast %3 : vector<1x256xf32> to vector<8x256xf32>
    %5 = arith.addf %2, %4 : vector<8x256xf32>
    %cst_5 = arith.constant 0.000000e+00 : f32
    %6 = vector.broadcast %cst_5 : f32 to vector<8x256xf32>
    %7 = arith.maximumf %5, %6 : vector<8x256xf32>
    %c0_6 = arith.constant 0 : index
    %c0_7 = arith.constant 0 : index
    %8 = vector.load %arg4[%c0_6, %c0_7] : memref<256x128xf32, #tpu.memory_space<vmem>>, vector<256x128xf32>
    %cst_8 = arith.constant dense<0.000000e+00> : vector<8x128xf32>
    %9 = tpu.matmul %7, %8, %cst_8 {dimension_numbers = #tpu.dot_dimension_numbers<[1], [0], [0], [1], [0, 0, 1, 1], [], []>} : vector<8x256xf32>, vector<256x128xf32>, vector<8x128xf32> -> vector<8x128xf32>
    %c0_9 = arith.constant 0 : index
    %c0_10 = arith.constant 0 : index
    %10 = vector.load %arg5[%c0_9, %c0_10] : memref<1x128xf32, #tpu.memory_space<vmem>>, vector<1x128xf32>
    %11 = vector.broadcast %10 : vector<1x128xf32> to vector<8x128xf32>
    %12 = arith.addf %9, %11 : vector<8x128xf32>
    %cst_11 = arith.constant 0.000000e+00 : f32
    %13 = vector.broadcast %cst_11 : f32 to vector<8x128xf32>
    %14 = arith.maximumf %12, %13 : vector<8x128xf32>
    %c0_12 = arith.constant 0 : index
    %c0_13 = arith.constant 0 : index
    %15 = vector.load %arg6[%c0_12, %c0_13] : memref<128x8xf32, #tpu.memory_space<vmem>>, vector<128x8xf32>
    %cst_14 = arith.constant dense<0.000000e+00> : vector<8x8xf32>
    %16 = tpu.matmul %14, %15, %cst_14 {dimension_numbers = #tpu.dot_dimension_numbers<[1], [0], [0], [1], [0, 0, 1, 1], [], []>} : vector<8x128xf32>, vector<128x8xf32>, vector<8x8xf32> -> vector<8x8xf32>
    %c0_15 = arith.constant 0 : index
    %c0_16 = arith.constant 0 : index
    %17 = vector.load %arg7[%c0_15, %c0_16] : memref<1x8xf32, #tpu.memory_space<vmem>>, vector<1x8xf32>
    %18 = vector.broadcast %17 : vector<1x8xf32> to vector<8x8xf32>
    %19 = arith.addf %16, %18 : vector<8x8xf32>
    %c0_17 = arith.constant 0 : index
    %c0_18 = arith.constant 0 : index
    %20 = vector.load %arg8[%c0_17, %c0_18] : memref<8x8xf32, #tpu.memory_space<vmem>>, vector<8x8xf32>
    tpu.vector_store %arg8[%c0_17, %c0_18], %19 {strides = array<i32>} : memref<8x8xf32, #tpu.memory_space<vmem>>, vector<8x8xf32>,
    return
  }
  func.func @transform_0(%arg0: i32) -> (i32, i32) {
    %c0_i32 = arith.constant 0 : i32
    %c0_i32_0 = arith.constant 0 : i32
    return %arg0, %c0_i32 : i32, i32
  }
  func.func @transform_1(%arg0: i32) -> (i32, i32) {
    %c0_i32 = arith.constant 0 : i32
    %c0_i32_0 = arith.constant 0 : i32
    %c0_i32_1 = arith.constant 0 : i32
    return %c0_i32, %c0_i32_0 : i32, i32
  }
  func.func @transform_2(%arg0: i32) -> (i32, i32) {
    %c0_i32 = arith.constant 0 : i32
    %c0_i32_0 = arith.constant 0 : i32
    %c0_i32_1 = arith.constant 0 : i32
    return %c0_i32, %c0_i32_0 : i32, i32
  }
  func.func @transform_3(%arg0: i32) -> (i32, i32) {
    %c0_i32 = arith.constant 0 : i32
    %c0_i32_0 = arith.constant 0 : i32
    %c0_i32_1 = arith.constant 0 : i32
    return %c0_i32, %c0_i32_0 : i32, i32
  }
  func.func @transform_4(%arg0: i32) -> (i32, i32) {
    %c0_i32 = arith.constant 0 : i32
    %c0_i32_0 = arith.constant 0 : i32
    %c0_i32_1 = arith.constant 0 : i32
    return %c0_i32, %c0_i32_0 : i32, i32
  }
  func.func @transform_5(%arg0: i32) -> (i32, i32) {
    %c0_i32 = arith.constant 0 : i32
    %c0_i32_0 = arith.constant 0 : i32
    %c0_i32_1 = arith.constant 0 : i32
    return %c0_i32, %c0_i32_0 : i32, i32
  }
  func.func @transform_6(%arg0: i32) -> (i32, i32) {
    %c0_i32 = arith.constant 0 : i32
    %c0_i32_0 = arith.constant 0 : i32
    %c0_i32_1 = arith.constant 0 : i32
    return %c0_i32, %c0_i32_0 : i32, i32
  }
  func.func @transform_7(%arg0: i32) -> (i32, i32) {
    %c0_i32 = arith.constant 0 : i32
    %c0_i32_0 = arith.constant 0 : i32
    return %arg0, %c0_i32 : i32, i32
  }
}

</mosaic_0001>

<llo_original>
// kernel: tpu_custom_call.1
$region0: #{tpu_custom_call.1}
  #allocation0 [shape = 'u32[]', space=smem, size = 0x4, offset = 0x4, fixed_abs, tag = 'smem constant byte address 0x4 - core index']
  #allocation1 [shape = 'u32[144,128]{1,0:T(1,128)}', space=vmem, size = 0x12000, scoped, tag = 'internal scratch']
  %s0 = inlined_call_operand.vmem [shape: f32[8,32], index: 0, kind: input, shape index: {}]
  %s1 = inlined_call_operand.vmem [shape: f32[32,256], index: 1, kind: input, shape index: {}]
  %s2 = inlined_call_operand.vmem [shape: f32[1,256], index: 2, kind: input, shape index: {}]
  %s3 = inlined_call_operand.hbm [shape: f32[256,128], index: 3, kind: input, shape index: {}]
  %s4 = inlined_call_operand.vmem [shape: f32[1,128], index: 4, kind: input, shape index: {}]
  %s5 = inlined_call_operand.vmem [shape: f32[128,8], index: 5, kind: input, shape index: {}]
  %s6 = inlined_call_operand.vmem [shape: f32[1,8], index: 6, kind: input, shape index: {}]
  %s7 = inlined_call_operand.hbm [shape: f32[8,8], index: 7, kind: output, shape index: {}]
  %s8 = sld [smem:[#allocation0]]
  $region42: #{tpu_custom_call.1} parent=0
    _
  %s10 = ssub.s32 1, %s8
  %s11 = scalar_select 0, %s10, %s8
  $region1: #{tpu_custom_call.1} parent=0
    #allocation2 [shape = 'u8[131072]{0}', space=vmem, size = 0x20000, scoped, tag = 'input window, operand 3, single buffered']
    #allocation3 [shape = 's32[1]{0}', space=sflag, size = 0x4, scoped, tag = 'scoped memory for tpu_custom_call.1']
    #allocation4 [shape = 's32[1]{0}', space=sflag, size = 0x4, scoped, tag = 'scoped memory for tpu_custom_call.1']
    #allocation5 [shape = 'u8[4096]{0}', space=vmem, size = 0x1000, scoped, tag = 'output window, operand 0, single buffered']
    %12 = vsyncpa [#allocation3], 0
    %13 = vsyncpa [#allocation4], 0
    // Predicated region
    $region2: #{tpu_custom_call.1} parent=1 // pred_check
      _
    $region3: #{tpu_custom_call.1} parent=1 // pred_check_branch
      %15 = sbr.rel (0) target = $region5
    $region4: #{tpu_custom_call.1} parent=1 // pred_region
      _
    $region5: #{tpu_custom_call.1} parent=1 // pred_fallthru
      _
    // Predicated region
    $region6: #{tpu_custom_call.1} parent=1 // pred_check
      _
    $region7: #{tpu_custom_call.1} parent=1 // pred_check_branch
      %17 = sbr.rel (0) target = $region9
    $region8: #{tpu_custom_call.1} parent=1 // pred_region
      _
    $region9: #{tpu_custom_call.1} parent=1 // pred_fallthru
      _
    // Predicated region
    $region10: #{tpu_custom_call.1} parent=1 // pred_check
      _
    $region11: #{tpu_custom_call.1} parent=1 // pred_check_branch
      %19 = sbr.rel (0) target = $region13
    $region12: #{tpu_custom_call.1} parent=1 // pred_region
      _
    $region13: #{tpu_custom_call.1} parent=1 // pred_fallthru
      _
    // Predicated region
    $region14: #{tpu_custom_call.1} parent=1 // pred_check
      _
    $region15: #{tpu_custom_call.1} parent=1 // pred_check_branch
      %21 = sbr.rel (0) target = $region17
    $region16: #{tpu_custom_call.1} parent=1 // pred_region
      %s23 = ssub.s32 4096, 4096
      %24 = vsyncadd [#allocation3], %s23
      %s25 = sshll.u32 [#allocation2], 4
      %s26 = int_to_ptr.vmem [resolvable:$true] %s25
      %31 = dma.hbm_to_vmem [thread:$0]  %s3, 4096, %s26, [#allocation3], 128, 128, 8
    $region17: #{tpu_custom_call.1} parent=1 // pred_fallthru
      _
    // Predicated region
    $region18: #{tpu_custom_call.1} parent=1 // pred_check
      _
    $region19: #{tpu_custom_call.1} parent=1 // pred_check_branch
      %33 = sbr.rel (0) target = $region21
    $region20: #{tpu_custom_call.1} parent=1 // pred_region
      _
    $region21: #{tpu_custom_call.1} parent=1 // pred_fallthru
      _
    // Predicated region
    $region22: #{tpu_custom_call.1} parent=1 // pred_check
      _
    $region23: #{tpu_custom_call.1} parent=1 // pred_check_branch
      %35 = sbr.rel (0) target = $region25
    $region24: #{tpu_custom_call.1} parent=1 // pred_region
      _
    $region25: #{tpu_custom_call.1} parent=1 // pred_fallthru
      _
    // Predicated region
    $region26: #{tpu_custom_call.1} parent=1 // pred_check
      _
    $region27: #{tpu_custom_call.1} parent=1 // pred_check_branch
      %37 = sbr.rel (0) target = $region29
    $region28: #{tpu_custom_call.1} parent=1 // pred_region
      _
    $region29: #{tpu_custom_call.1} parent=1 // pred_fallthru
      _
    // Predicated region
    $region30: #{tpu_custom_call.1} parent=1 // pred_check
      _
    $region31: #{tpu_custom_call.1} parent=1 // pred_check_branch
      %39 = sbr.rel (0) target = $region33
    $region32: #{tpu_custom_call.1} parent=1 // pred_region
      %40 = dma.done [#allocation3], 4096
    $region33: #{tpu_custom_call.1} parent=1 // pred_fallthru
      _
    %v41 = vld [vmem:[%s0] sm:$0xff]
    %v42 = vld [vmem:[%s1] sm:$0xff]
    %v43 = vld [vmem:[%s1 + $0x8] sm:$0xff]
    %v44 = vld [vmem:[%s1 + $0x10] sm:$0xff]
    %v45 = vld [vmem:[%s1 + $0x18] sm:$0xff]
    %v46 = vld [vmem:[%s1 + $0x20] sm:$0xff]
    %v47 = vld [vmem:[%s1 + $0x28] sm:$0xff]
    %v48 = vld [vmem:[%s1 + $0x30] sm:$0xff]
    %v49 = vld [vmem:[%s1 + $0x38] sm:$0xff]
    %v50 = vld [vmem:[%s2] sm:$0x3]
    %v52 = vlaneseq
    %v53 = vshrl.u32 %v52, 7
    %v54 = vsub.s32 0, %v53
    %v55 = vrot.slane %v50, %v54
    %v56 = vlaneseq
    %v57 = vshrl.u32 %v56, 7
    %v58 = vsub.s32 1, %v57
    %v59 = vrot.slane %v50, %v58
    %vm62 = vcmask 261120
    %v64 = vsel %vm62, %v41, 0
    %66 = vmatprep.subr.mxu0 0.0
    %67 = vmatpush1.msra.mxu0 0.0
    %68 = vmatprep.subr.mxu0 0.0
    %69 = vmatpush1.msra.mxu0 0.0
    %70 = vmatprep.subr.mxu0 0.0
    %71 = vmatpush1.msra.mxu0 0.0
    %72 = vmatprep.subr.mxu0 0.0
    %73 = vmatpush1.msra.mxu0 0.0
    %74 = vmatprep.subr.mxu0 0.0
    %75 = vmatpush1.msra.mxu0 0.0
    %76 = vmatprep.subr.mxu0 0.0
    %77 = vmatpush1.msra.mxu0 0.0
    %78 = vmatprep.subr.mxu0 0.0
    %79 = vmatpush1.msra.mxu0 0.0
    %80 = vmatprep.subr.mxu0 0.0
    %81 = vmatpush1.msra.mxu0 0.0
    %82 = vmatprep.subr.mxu0 0.0
    %83 = vmatpush1.msra.mxu0 0.0
    %84 = vmatprep.subr.mxu0 0.0
    %85 = vmatpush1.msra.mxu0 0.0
    %86 = vmatprep.subr.mxu0 0.0
    %87 = vmatpush1.msra.mxu0 0.0
    %88 = vmatprep.subr.mxu0 0.0
    %89 = vmatpush1.msra.mxu0 0.0
    %90 = vmatprep.subr.mxu0 %v49
    %91 = vmatpush1.msra.mxu0 %v48
    %92 = vmatprep.subr.mxu0 %v47
    %93 = vmatpush1.msra.mxu0 %v46
    %94 = vmatprep.subr.mxu0 %v45
    %95 = vmatpush1.msra.mxu0 %v44
    %96 = vmatprep.subr.mxu0 %v43
    %97 = vmatpush1.msra.mxu0 %v42
    %98 = vmatprep.subr.mxu0 0.0
    %99 = vmatpush2.msra.mxu0 0.0
    %100 = vmatprep.subr.mxu0 0.0
    %101 = vmatpush2.msra.mxu0 0.0
    %102 = vmatprep.subr.mxu0 0.0
    %103 = vmatpush2.msra.mxu0 0.0
    %104 = vmatprep.subr.mxu0 0.0
    %105 = vmatpush2.msra.mxu0 0.0
    %106 = vmatprep.subr.mxu0 0.0
    %107 = vmatpush2.msra.mxu0 0.0
    %108 = vmatprep.subr.mxu0 0.0
    %109 = vmatpush2.msra.mxu0 0.0
    %110 = vmatprep.subr.mxu0 0.0
    %111 = vmatpush2.msra.mxu0 0.0
    %112 = vmatprep.subr.mxu0 0.0
    %113 = vmatpush2.msra.mxu0 0.0
    %114 = vmatprep.subr.mxu0 0.0
    %115 = vmatpush2.msra.mxu0 0.0
    %116 = vmatprep.subr.mxu0 0.0
    %117 = vmatpush2.msra.mxu0 0.0
    %118 = vmatprep.subr.mxu0 0.0
    %119 = vmatpush2.msra.mxu0 0.0
    %120 = vmatprep.subr.mxu0 0.0
    %121 = vmatpush2.msra.mxu0 0.0
    %122 = vmatprep.subr.mxu0 0.0
    %123 = vmatpush2.msra.mxu0 0.0
    %124 = vmatprep.subr.mxu0 0.0
    %125 = vmatpush2.msra.mxu0 0.0
    %126 = vmatprep.subr.mxu0 0.0
    %127 = vmatpush2.msra.mxu0 0.0
    %128 = vmatprep.subr.mxu0 0.0
    %129 = vmatpush2.msra.mxu0 0.0
    %130 = vmatprep.mubr.f32.mxu0 0.0
    %131 = vmatmul.mubr.f32.gmra.mxu0 %v64
    %v132 = vpop.f32.mrf.mxu0
    %v133 = vadd.f32 %v55, %v132
    %v134 = vpop.f32.mrf.mxu0
    %v135 = vadd.f32 %v59, %v134
    %136 = vdwg.mxu0
    %v137 = vmax.f32 %v133, 0.0
    %v138 = vmax.f32 %v135, 0.0
    %v139 = vld [vmem:[#allocation2] sm:$0xff]
    %v140 = vld [vmem:[#allocation2 + $0x8] sm:$0xff]
    %v141 = vld [vmem:[#allocation2 + $0x10] sm:$0xff]
    %v142 = vld [vmem:[#allocation2 + $0x18] sm:$0xff]
    %v143 = vld [vmem:[#allocation2 + $0x20] sm:$0xff]
    %v144 = vld [vmem:[#allocation2 + $0x28] sm:$0xff]
    %v145 = vld [vmem:[#allocation2 + $0x30] sm:$0xff]
    %v146 = vld [vmem:[#allocation2 + $0x38] sm:$0xff]
    %v147 = vld [vmem:[#allocation2 + $0x40] sm:$0xff]
    %v148 = vld [vmem:[#allocation2 + $0x48] sm:$0xff]
    %v149 = vld [vmem:[#allocation2 + $0x50] sm:$0xff]
    %v150 = vld [vmem:[#allocation2 + $0x58] sm:$0xff]
    %v151 = vld [vmem:[#allocation2 + $0x60] sm:$0xff]
    %v152 = vld [vmem:[#allocation2 + $0x68] sm:$0xff]
    %v153 = vld [vmem:[#allocation2 + $0x70] sm:$0xff]
    %v154 = vld [vmem:[#allocation2 + $0x78] sm:$0xff]
    %v155 = vld [vmem:[#allocation2 + $0x80] sm:$0xff]
    %v156 = vld [vmem:[#allocation2 + $0x88] sm:$0xff]
    %v157 = vld [vmem:[#allocation2 + $0x90] sm:$0xff]
    %v158 = vld [vmem:[#allocation2 + $0x98] sm:$0xff]
    %v159 = vld [vmem:[#allocation2 + $0xa0] sm:$0xff]
    %v160 = vld [vmem:[#allocation2 + $0xa8] sm:$0xff]
    %v161 = vld [vmem:[#allocation2 + $0xb0] sm:$0xff]
    %v162 = vld [vmem:[#allocation2 + $0xb8] sm:$0xff]
    %v163 = vld [vmem:[#allocation2 + $0xc0] sm:$0xff]
    %v164 = vld [vmem:[#allocation2 + $0xc8] sm:$0xff]
    %v165 = vld [vmem:[#allocation2 + $0xd0] sm:$0xff]
    %v166 = vld [vmem:[#allocation2 + $0xd8] sm:$0xff]
    %v167 = vld [vmem:[#allocation2 + $0xe0] sm:$0xff]
    %v168 = vld [vmem:[#allocation2 + $0xe8] sm:$0xff]
    %v169 = vld [vmem:[#allocation2 + $0xf0] sm:$0xff]
    %v170 = vld [vmem:[#allocation2 + $0xf8] sm:$0xff]
    %v171 = vld [vmem:[%s4] sm:$0x1]
    %v173 = vlaneseq
    %v174 = vshrl.u32 %v173, 7
    %v175 = vsub.s32 0, %v174
    %v176 = vrot.slane %v171, %v175
    %178 = vmatprep.subr.mxu0 0.0
    %179 = vmatpush1.msra.mxu0 %v154
    %180 = vmatprep.subr.mxu0 0.0
    %181 = vmatpush1.msra.mxu0 %v153
    %182 = vmatprep.subr.mxu0 0.0
    %183 = vmatpush1.msra.mxu0 %v152
    %184 = vmatprep.subr.mxu0 0.0
    %185 = vmatpush1.msra.mxu0 %v151
    %186 = vmatprep.subr.mxu0 0.0
    %187 = vmatpush1.msra.mxu0 %v150
    %188 = vmatprep.subr.mxu0 0.0
    %189 = vmatpush1.msra.mxu0 %v149
    %190 = vmatprep.subr.mxu0 0.0
    %191 = vmatpush1.msra.mxu0 %v148
    %192 = vmatprep.subr.mxu0 0.0
    %193 = vmatpush1.msra.mxu0 %v147
    %194 = vmatprep.subr.mxu0 0.0
    %195 = vmatpush1.msra.mxu0 %v146
    %196 = vmatprep.subr.mxu0 0.0
    %197 = vmatpush1.msra.mxu0 %v145
    %198 = vmatprep.subr.mxu0 0.0
    %199 = vmatpush1.msra.mxu0 %v144
    %200 = vmatprep.subr.mxu0 0.0
    %201 = vmatpush1.msra.mxu0 %v143
    %202 = vmatprep.subr.mxu0 0.0
    %203 = vmatpush1.msra.mxu0 %v142
    %204 = vmatprep.subr.mxu0 0.0
    %205 = vmatpush1.msra.mxu0 %v141
    %206 = vmatprep.subr.mxu0 0.0
    %207 = vmatpush1.msra.mxu0 %v140
    %208 = vmatprep.subr.mxu0 0.0
    %209 = vmatpush1.msra.mxu0 %v139
    %210 = vmatprep.subr.mxu0 0.0
    %211 = vmatpush2.msra.mxu0 %v170
    %212 = vmatprep.subr.mxu0 0.0
    %213 = vmatpush2.msra.mxu0 %v169
    %214 = vmatprep.subr.mxu0 0.0
    %215 = vmatpush2.msra.mxu0 %v168
    %216 = vmatprep.subr.mxu0 0.0
    %217 = vmatpush2.msra.mxu0 %v167
    %218 = vmatprep.subr.mxu0 0.0
    %219 = vmatpush2.msra.mxu0 %v166
    %220 = vmatprep.subr.mxu0 0.0
    %221 = vmatpush2.msra.mxu0 %v165
    %222 = vmatprep.subr.mxu0 0.0
    %223 = vmatpush2.msra.mxu0 %v164
    %224 = vmatprep.subr.mxu0 0.0
    %225 = vmatpush2.msra.mxu0 %v163
    %226 = vmatprep.subr.mxu0 0.0
    %227 = vmatpush2.msra.mxu0 %v162
    %228 = vmatprep.subr.mxu0 0.0
    %229 = vmatpush2.msra.mxu0 %v161
    %230 = vmatprep.subr.mxu0 0.0
    %231 = vmatpush2.msra.mxu0 %v160
    %232 = vmatprep.subr.mxu0 0.0
    %233 = vmatpush2.msra.mxu0 %v159
    %234 = vmatprep.subr.mxu0 0.0
    %235 = vmatpush2.msra.mxu0 %v158
    %236 = vmatprep.subr.mxu0 0.0
    %237 = vmatpush2.msra.mxu0 %v157
    %238 = vmatprep.subr.mxu0 0.0
    %239 = vmatpush2.msra.mxu0 %v156
    %240 = vmatprep.subr.mxu0 0.0
    %241 = vmatpush2.msra.mxu0 %v155
    %242 = vmatprep.mubr.f32.mxu0 %v138
    %243 = vmatmul.mubr.f32.gmra.mxu0 %v137
    %v244 = vpop.f32.mrf.mxu0
    %v245 = vadd.f32 %v176, %v244
    %v246 = vpop.f32.mrf.mxu0
    %247 = vdwg.mxu0
    %v248 = vmax.f32 %v245, 0.0
    %v249 = vld [vmem:[%s5] sm:$0xff]
    %v250 = vld [vmem:[%s5 + $0x8] sm:$0xff]
    %v251 = vld [vmem:[%s5 + $0x10] sm:$0xff]
    %v252 = vld [vmem:[%s5 + $0x18] sm:$0xff]
    %v253 = vld [vmem:[%s5 + $0x20] sm:$0xff]
    %v254 = vld [vmem:[%s5 + $0x28] sm:$0xff]
    %v255 = vld [vmem:[%s5 + $0x30] sm:$0xff]
    %v256 = vld [vmem:[%s5 + $0x38] sm:$0xff]
    %v257 = vld [vmem:[%s5 + $0x40] sm:$0xff]
    %v258 = vld [vmem:[%s5 + $0x48] sm:$0xff]
    %v259 = vld [vmem:[%s5 + $0x50] sm:$0xff]
    %v260 = vld [vmem:[%s5 + $0x58] sm:$0xff]
    %v261 = vld [vmem:[%s5 + $0x60] sm:$0xff]
    %v262 = vld [vmem:[%s5 + $0x68] sm:$0xff]
    %v263 = vld [vmem:[%s5 + $0x70] sm:$0xff]
    %v264 = vld [vmem:[%s5 + $0x78] sm:$0xff]
    %v265 = vld [vmem:[%s6] sm:$0x1]
    %v267 = vlaneseq
    %v268 = vshrl.u32 %v267, 7
    %v269 = vsub.s32 0, %v268
    %v270 = vrot.slane %v265, %v269
    %272 = vmatprep.subr.mxu0 0.0
    %273 = vmatpush1.msra.mxu0 %v264
    %274 = vmatprep.subr.mxu0 0.0
    %275 = vmatpush1.msra.mxu0 %v263
    %276 = vmatprep.subr.mxu0 0.0
    %277 = vmatpush1.msra.mxu0 %v262
    %278 = vmatprep.subr.mxu0 0.0
    %279 = vmatpush1.msra.mxu0 %v261
    %280 = vmatprep.subr.mxu0 0.0
    %281 = vmatpush1.msra.mxu0 %v260
    %282 = vmatprep.subr.mxu0 0.0
    %283 = vmatpush1.msra.mxu0 %v259
    %284 = vmatprep.subr.mxu0 0.0
    %285 = vmatpush1.msra.mxu0 %v258
    %286 = vmatprep.subr.mxu0 0.0
    %287 = vmatpush1.msra.mxu0 %v257
    %288 = vmatprep.subr.mxu0 0.0
    %289 = vmatpush1.msra.mxu0 %v256
    %290 = vmatprep.subr.mxu0 0.0
    %291 = vmatpush1.msra.mxu0 %v255
    %292 = vmatprep.subr.mxu0 0.0
    %293 = vmatpush1.msra.mxu0 %v254
    %294 = vmatprep.subr.mxu0 0.0
    %295 = vmatpush1.msra.mxu0 %v253
    %296 = vmatprep.subr.mxu0 0.0
    %297 = vmatpush1.msra.mxu0 %v252
    %298 = vmatprep.subr.mxu0 0.0
    %299 = vmatpush1.msra.mxu0 %v251
    %300 = vmatprep.subr.mxu0 0.0
    %301 = vmatpush1.msra.mxu0 %v250
    %302 = vmatprep.subr.mxu0 0.0
    %303 = vmatpush1.msra.mxu0 %v249
    %304 = vmatprep.subr.mxu0 0.0
    %305 = vmatpush2.msra.mxu0 0.0
    %306 = vmatprep.subr.mxu0 0.0
    %307 = vmatpush2.msra.mxu0 0.0
    %308 = vmatprep.subr.mxu0 0.0
    %309 = vmatpush2.msra.mxu0 0.0
    %310 = vmatprep.subr.mxu0 0.0
    %311 = vmatpush2.msra.mxu0 0.0
    %312 = vmatprep.subr.mxu0 0.0
    %313 = vmatpush2.msra.mxu0 0.0
    %314 = vmatprep.subr.mxu0 0.0
    %315 = vmatpush2.msra.mxu0 0.0
    %316 = vmatprep.subr.mxu0 0.0
    %317 = vmatpush2.msra.mxu0 0.0
    %318 = vmatprep.subr.mxu0 0.0
    %319 = vmatpush2.msra.mxu0 0.0
    %320 = vmatprep.subr.mxu0 0.0
    %321 = vmatpush2.msra.mxu0 0.0
    %322 = vmatprep.subr.mxu0 0.0
    %323 = vmatpush2.msra.mxu0 0.0
    %324 = vmatprep.subr.mxu0 0.0
    %325 = vmatpush2.msra.mxu0 0.0
    %326 = vmatprep.subr.mxu0 0.0
    %327 = vmatpush2.msra.mxu0 0.0
    %328 = vmatprep.subr.mxu0 0.0
    %329 = vmatpush2.msra.mxu0 0.0
    %330 = vmatprep.subr.mxu0 0.0
    %331 = vmatpush2.msra.mxu0 0.0
    %332 = vmatprep.subr.mxu0 0.0
    %333 = vmatpush2.msra.mxu0 0.0
    %334 = vmatprep.subr.mxu0 0.0
    %335 = vmatpush2.msra.mxu0 0.0
    %336 = vmatprep.mubr.f32.mxu0 0.0
    %337 = vmatmul.mubr.f32.gmra.mxu0 %v248
    %v338 = vpop.f32.mrf.mxu0
    %v339 = vadd.f32 %v270, %v338
    %v340 = vpop.f32.mrf.mxu0
    %341 = vdwg.mxu0
    %vm342 = vcmask 64512
    %343 = vst.msk [vmem:[#allocation5] sm:$0xff] %vm342, %v339
    // Predicated region
    $region34: #{tpu_custom_call.1} parent=1 // pred_check
      _
    $region35: #{tpu_custom_call.1} parent=1 // pred_check_branch
      %345 = sbr.rel (0) target = $region37
    $region36: #{tpu_custom_call.1} parent=1 // pred_region
      %s347 = ssub.s32 128, 128
      %348 = vsyncadd [#allocation4], %s347
      %s350 = sshll.u32 [#allocation5], 4
      %s351 = int_to_ptr.vmem [resolvable:$true] %s350
      %353 = dma.vmem_to_hbm [thread:$0]  %s351, 128, %s7, [#allocation4]
    $region37: #{tpu_custom_call.1} parent=1 // pred_fallthru
      _
    // Predicated region
    $region38: #{tpu_custom_call.1} parent=1 // pred_check
      _
    $region39: #{tpu_custom_call.1} parent=1 // pred_check_branch
      %355 = sbr.rel (0) target = $region41
    $region40: #{tpu_custom_call.1} parent=1 // pred_region
      %356 = dma.done [#allocation4], 128
    $region41: #{tpu_custom_call.1} parent=1 // pred_fallthru
      _
    %357 = vsyncpa [#allocation3], 1
    %358 = vsyncpa [#allocation4], 1

</llo_original>
